<compile_context>
chip_gen: v7x
topology: tpu7x:2x2x1
jax: 0.10.0
libtpu: 0.0.40
codegen_flags: <defaults>
</compile_context>

<pallas_src>
import functools

import jax
import jax.numpy as jnp
from jax.experimental import pallas as pl
from jax.experimental.pallas import tpu as pltpu


def _round_up(v, m):
    return -(-v // m) * m


# ----------------------------------------------------------------------------
# Keras -> Torch padding conversion (same math as the reference, no torch).
# ----------------------------------------------------------------------------
def _keras_to_torch_padding(kernel_size, stride, dilation_rate, padding,
                            output_padding):
    assert padding.lower() in {"valid", "same"}
    kernel_size = (kernel_size - 1) * dilation_rate + 1
    if padding.lower() == "valid":
        output_padding = (max(kernel_size, stride) - kernel_size
                          if output_padding is None else output_padding)
        torch_padding = 0
        torch_output_padding = output_padding
    else:
        output_padding = (stride - kernel_size % 2
                          if output_padding is None else output_padding)
        torch_padding = max(
            -((kernel_size % 2 - kernel_size + output_padding) // 2), 0)
        torch_output_padding = (2 * torch_padding + kernel_size % 2
                                - kernel_size + output_padding)
    if torch_output_padding >= stride:
        raise ValueError("torch output_padding >= stride is not supported")
    return torch_padding, torch_output_padding


# ----------------------------------------------------------------------------
# Phase-FOLDED weights:
#   W[ci, co, kh, kw] -> W2[(mh*MW + mw)*C_in + ci, (rh*sw + rw)*C_out + co]
# with rh=(kh*dh)%sh, mh=(kh*dh)//sh (likewise for columns).  A single matrix
# for ALL sh*sw phases: one matmul produces every phase at once, phases living
# in the output minor dim.
# ----------------------------------------------------------------------------
def _build_phase_weights(weight, stride, dilation):
    C_in, C_out, KH, KW = weight.shape
    sh, sw = stride
    dh, dw = dilation
    MH = ((KH - 1) * dh) // sh + 1
    MW = ((KW - 1) * dw) // sw + 1
    w2 = jnp.zeros((MH * MW * C_in, sh * sw * C_out), weight.dtype)
    for kh in range(KH):
        rh, mh = (kh * dh) % sh, (kh * dh) // sh
        for kw in range(KW):
            rw, mw = (kw * dw) % sw, (kw * dw) // sw
            row = (mh * MW + mw) * C_in
            col = (rh * sw + rw) * C_out
            w2 = w2.at[row:row + C_in, col:col + C_out].set(
                weight[:, :, kh, kw])
    return w2, MH, MW


# ----------------------------------------------------------------------------
# Pallas kernel: one batch element x one tile of TQ output row-groups
# (all output columns, all sh*sw phases folded into the minor dim).
# ----------------------------------------------------------------------------
def _conv_t_kernel(x_ref, w_ref, b_ref, o_ref, *, TQ, NP, C_in, MH, MW,
                   row_base, col_base, flat_w):
    """
    x_ref : (1, Hp, Wp*C_in) if flat_w else (1, Hp, Wp, C_in)  zero-haloed input
    w_ref : (MH*MW*C_in, n_phases*C_out)   phase-folded weights
    b_ref : (1, n_phases*C_out)            f32 bias, pre-tiled over phases
    o_ref : (1, TQ*NP, n_phases*C_out)     extended-output tile
    """
    r_tile = pl.program_id(1) * TQ

    # Build the im2col patch ONCE per tile; it is shared by every phase.
    taps = []
    for mh in range(MH):
        r0 = r_tile + (row_base - mh)               # dynamic start, static size
        for mw in range(MW):
            if flat_w:
                c0 = (col_base - mw) * C_in          # static lane start
                t = x_ref[0, pl.ds(r0, TQ), c0:c0 + NP * C_in]
            else:
                c0 = col_base - mw
                t = x_ref[0, pl.ds(r0, TQ), c0:c0 + NP, :]
            taps.append(t.reshape(TQ * NP, C_in))
    patch = jnp.concatenate(taps, axis=-1)           # (TQ*NP, MH*MW*C_in)
    # TODO(synk): if bundle dumps show ld/st or VALU slots binding on the
    # concat, assemble the patch into a VMEM scratch buffer with per-tap stores.

    # Single MXU matmul for ALL phases; f32 accumulation; bias added once.
    res = jnp.dot(patch, w_ref[...], preferred_element_type=jnp.float32)
    res = res + b_ref[...]
    o_ref[0] = res.astype(o_ref.dtype)


# ----------------------------------------------------------------------------
# NHWC transposed conv via the phase-folded Pallas kernel.
# ----------------------------------------------------------------------------
def _conv_transpose2d_nhwc(x, w2, bias2, *, kernel_size, stride, dilation,
                           torch_padding, torch_output_padding, MH, MW,
                           out_dtype=None):
    """x: (N, H, W, C_in) NHWC -> (N, H_out, W_out, C_out) NHWC."""
    N, H, W, C_in = x.shape
    K_tot, NC = w2.shape
    KH, KW = kernel_size
    sh, sw = stride
    dh, dw = dilation
    pad_h, pad_w = torch_padding
    oph, opw = torch_output_padding
    n_phases = sh * sw
    C_out = NC // n_phases
    out_dtype = x.dtype if out_dtype is None else out_dtype

    kh_eff = (KH - 1) * dh + 1
    kw_eff = (KW - 1) * dw + 1
    H_out = (H - 1) * sh - 2 * pad_h + kh_eff + oph
    W_out = (W - 1) * sw - 2 * pad_w + kw_eff + opw

    # Phase-grid geometry.
    q_start, rh0 = pad_h // sh, pad_h % sh
    p_start, rw0 = pad_w // sw, pad_w % sw
    n_q = (H_out - 1 + pad_h) // sh - q_start + 1
    n_p = (W_out - 1 + pad_w) // sw - p_start + 1
    NP = _round_up(n_p, 8)                           # sublane-friendly columns

    # Generation-aware budgets (v7x: 64 MiB physical VMEM; v5e/v6e: 128 MiB).
    try:
        vmem_cap = int(pltpu.get_tpu_info().vmem_capacity_bytes)
    except Exception:                                 # non-TPU / older API
        vmem_cap = 64 * 1024 * 1024
    vmem_cap = max(vmem_cap, 32 * 1024 * 1024)

    x_itm = jnp.dtype(x.dtype).itemsize
    out_itm = jnp.dtype(out_dtype).itemsize
    w_itm = jnp.dtype(w2.dtype).itemsize
    NC_pad = _round_up(NC, 128)
    K_pad = _round_up(K_tot, 128)

    # Row-group tile size: big tiles amortise the ~0.35us/step overhead and the
    # MXU weight push; ~8 MiB working-set target on 128 MiB parts, ~4 MiB on
    # v7x.  The resident input, not the tile, usually dominates VMEM.
    tile_target = (8 if vmem_cap >= 96 * 1024 * 1024 else 4) * 1024 * 1024
    per_q = NP * (2 * K_pad * x_itm + NC_pad * (2 * out_itm + 4))
    TQ = max(1, min(n_q, tile_target // max(per_q, 1)))
    if N == 1 and n_q >= 4:
        # Batch 1: keep >= 2 spatial tiles so megacore / v7x's second
        # TensorCore gets work.  TODO(synk): probe the TensorCore count and
        # skip this split on single-core v5e/v6e.
        TQ = min(TQ, -(-n_q // 2))
    n_qt = -(-n_q // TQ)
    n_q_pad = n_qt * TQ

    # Small zero halo around the ORIGINAL (un-dilated) input.
    pad_top = max(0, (MH - 1) - q_start)
    pad_left = max(0, (MW - 1) - p_start)
    Hp = max(pad_top + H, pad_top + q_start + n_q_pad)
    Wp = max(pad_left + W, pad_left + p_start + NP)
    xp = jnp.pad(x, ((0, 0), (pad_top, Hp - pad_top - H),
                     (pad_left, Wp - pad_left - W), (0, 0)))
    row_base = q_start + pad_top
    col_base = p_start + pad_left

    # Fold W into the lane dim when C_in is narrow (dense DMA, no lane padding
    # of the resident input block).
    flat_pref = C_in < 128
    if flat_pref:
        in_block_bytes = _round_up(Hp, 8) * _round_up(Wp * C_in, 128) * x_itm
    else:
        in_block_bytes = Hp * _round_up(Wp, 8) * _round_up(C_in, 128) * x_itm

    # Single-buffer grid-invariant operands (weights / bias always; the
    # resident input too when double-buffering it would eat a big VMEM slice).
    sb_input = 2 * in_block_bytes > vmem_cap // 3

    w_bytes = _round_up(K_tot, 8) * NC_pad * w_itm
    out_block_bytes = TQ * NP * NC_pad * out_itm
    patch_bytes = TQ * NP * K_pad * x_itm
    est = ((1 if sb_input else 2) * in_block_bytes + 2 * w_bytes
           + 2 * out_block_bytes + 2 * patch_bytes + TQ * NP * NC_pad * 4
           + 8 * NC_pad)
    vmem_limit = int(min(int(0.65 * vmem_cap),
                         max(16 * 1024 * 1024, 2 * est)))
    # TODO(synk): when even the single-buffered whole image cannot fit (huge
    # H*W*C_in on v7x), switch the input spec to memory_space=pl.ANY and stream
    # row windows with a manual make_async_copy double buffer.

    def _run(flat_w, single_buffer):
        if flat_w:
            x_in = xp.reshape(N, Hp, Wp * C_in)       # contiguous: free in XLA
            in_block = (1, Hp, Wp * C_in)
            in_map = lambda n, qt: (n, 0, 0)
        else:
            x_in = xp
            in_block = (1, Hp, Wp, C_in)
            in_map = lambda n, qt: (n, 0, 0, 0)

        def spec(shape, index_map, want_single):
            if single_buffer and want_single:
                return pl.BlockSpec(shape, index_map,
                                    pipeline_mode=pl.Buffered(1))
            return pl.BlockSpec(shape, index_map)

        kern = functools.partial(
            _conv_t_kernel, TQ=TQ, NP=NP, C_in=C_in, MH=MH, MW=MW,
            row_base=row_base, col_base=col_base, flat_w=flat_w)

        return pl.pallas_call(
            kern,
            out_shape=jax.ShapeDtypeStruct((N, n_q_pad * NP, NC), out_dtype),
            grid=(N, n_qt),
            in_specs=[
                spec(in_block, in_map, sb_input),
                spec((K_tot, NC), lambda n, qt: (0, 0), True),
                spec((1, NC), lambda n, qt: (0, 0), True),
            ],
            out_specs=pl.BlockSpec((1, TQ * NP, NC),
                                   lambda n, qt: (n, qt, 0)),
            compiler_params=pltpu.CompilerParams(
                dimension_semantics=("parallel", "parallel"),
                vmem_limit_bytes=vmem_limit),
        )(x_in, w2, bias2)

    try:
        out_ext = _run(flat_pref, True)
    except Exception:
        # Conservative fallback (un-folded input, default double buffering) for
        # JAX/Mosaic builds that reject the optimized configuration; computes
        # the identical result.
        out_ext = _run(False, False)

    # Depth-to-space interleave of the phases + boundary crop.  XLA fuses this
    # reshape/transpose/slice chain (plus the caller's final permutation) into
    # a single copy of the output.
    y = out_ext.reshape(N, n_q_pad, NP, sh, sw, C_out)
    y = jnp.transpose(y, (0, 1, 3, 2, 4, 5))
    y = y.reshape(N, n_q_pad * sh, NP * sw, C_out)
    return y[:, rh0:rh0 + H_out, rw0:rw0 + W_out, :]


# ----------------------------------------------------------------------------
# Module-equivalent wrapper (num_spatial_dims == 2).
# ----------------------------------------------------------------------------
class ConvTransposeNdPallas:
    def __init__(self, num_spatial_dims, in_channels, out_channels,
                 kernel_size, stride=1, padding="valid", output_padding=None,
                 dilation=1, channel_last=True, matmul_dtype=jnp.bfloat16,
                 *, key):
        if num_spatial_dims != 2:
            # TODO(synk): 1-D / 3-D variants follow the same phase-folded
            # recipe; only the 2-D case is implemented here.
            raise NotImplementedError("only num_spatial_dims=2 implemented")
        if isinstance(kernel_size, int):
            kernel_size = (kernel_size,) * num_spatial_dims
        if isinstance(stride, int):
            stride = (stride,) * num_spatial_dims
        if isinstance(dilation, int):
            dilation = (dilation,) * num_spatial_dims

        tp, top = [], []
        for i in range(num_spatial_dims):
            op_i = (output_padding if output_padding is None
                    or isinstance(output_padding, int) else output_padding[i])
            p, o = _keras_to_torch_padding(kernel_size[i], stride[i],
                                           dilation[i], padding, op_i)
            tp.append(p)
            top.append(o)

        self.kernel_size = tuple(kernel_size)
        self.stride = tuple(stride)
        self.dilation = tuple(dilation)
        self.torch_padding = tuple(tp)
        self.torch_output_padding = tuple(top)
        self.channel_last = channel_last
        # bf16-in / f32-acc is the MXU fast path on v5e/v6e/v7x; pass
        # matmul_dtype=None to keep the input dtype end-to-end (opt-out).
        self.matmul_dtype = matmul_dtype

        # Deterministic parameter init (torch ConvTranspose2d shapes):
        #   weight: (in_channels, out_channels, KH, KW), bias: (out_channels,)
        k_w, k_b = jax.random.split(key)
        fan_in = out_channels * kernel_size[0] * kernel_size[1]
        bound = 1.0 / (fan_in ** 0.5)
        self.weight = jax.random.uniform(
            k_w, (in_channels, out_channels) + self.kernel_size,
            dtype=jnp.float32, minval=-bound, maxval=bound)
        self.bias = jax.random.uniform(
            k_b, (out_channels,), dtype=jnp.float32,
            minval=-bound, maxval=bound)

        # Phase-folded weights + phase-tiled f32 bias, built ONCE at init.
        w2, self._MH, self._MW = _build_phase_weights(
            self.weight, self.stride, self.dilation)
        if matmul_dtype is not None:
            w2 = w2.astype(matmul_dtype)
        self.w2 = w2
        n_phases = self.stride[0] * self.stride[1]
        self.bias2 = jnp.tile(self.bias, n_phases).reshape(
            1, n_phases * out_channels).astype(jnp.float32)

    def __call__(self, x):
        out_dtype = x.dtype
        x_nhwc = x if self.channel_last else jnp.transpose(x, (0, 2, 3, 1))
        if self.matmul_dtype is not None:
            x_nhwc = x_nhwc.astype(self.matmul_dtype)
        y_nhwc = _conv_transpose2d_nhwc(
            x_nhwc, self.w2, self.bias2,
            kernel_size=self.kernel_size, stride=self.stride,
            dilation=self.dilation, torch_padding=self.torch_padding,
            torch_output_padding=self.torch_output_padding,
            MH=self._MH, MW=self._MW, out_dtype=out_dtype)
        if self.channel_last:
            # reference: NHWC -> NCHW -> conv_t -> permute(0,3,1,2), i.e. the
            # NHWC result permuted by (0,2,3,1) -> (N, W_out, C_out, H_out).
            return jnp.transpose(y_nhwc, (0, 2, 3, 1))
        return jnp.transpose(y_nhwc, (0, 3, 1, 2))


if __name__ == "__main__":
    key = jax.random.PRNGKey(0)
    k_x, k_p = jax.random.split(key)

    # Small config: batch=2, H=W=8, in_channels=4, out_channels=8,
    # kernel_size=3, stride=2, padding='valid' (channels_last input).
    N, H, W, C_in, C_out = 2, 8, 8, 4, 8
    x = jax.random.normal(k_x, (N, H, W, C_in), dtype=jnp.float32)

    def reference(module, xin):
        # Transposed conv == unit-stride correlation of the stride-dilated
        # input with the spatially flipped kernel.
        KH, KW = module.kernel_size
        dh, dw = module.dilation
        kh_eff = (KH - 1) * dh + 1
        kw_eff = (KW - 1) * dw + 1
        ph, pw = module.torch_padding
        oph, opw = module.torch_output_padding
        y = jax.lax.conv_general_dilated(
            xin,
            jnp.transpose(jnp.flip(module.weight, (2, 3)), (2, 3, 0, 1)),
            window_strides=(1, 1),
            padding=[(kh_eff - 1 - ph, kh_eff - 1 - ph + oph),
                     (kw_eff - 1 - pw, kw_eff - 1 - pw + opw)],
            lhs_dilation=module.stride,
            rhs_dilation=module.dilation,
            dimension_numbers=("NHWC", "HWIO", "NHWC"),
            precision=jax.lax.Precision.HIGHEST,
        ) + module.bias
        return jnp.transpose(y, (0, 2, 3, 1))   # the module's final permutation

    H_out = (H - 1) * 2 + 3
    W_out = (W - 1) * 2 + 3

    # f32 MXU path: exact-math check against the pure-JAX reference.
    mod_f32 = ConvTransposeNdPallas(
        num_spatial_dims=2, in_channels=C_in, out_channels=C_out,
        kernel_size=3, stride=2, padding="valid", channel_last=True,
        matmul_dtype=None, key=k_p)
    y_f32 = jax.block_until_ready(mod_f32(x))
    ref = reference(mod_f32, x)
    assert y_f32.shape == (N, W_out, C_out, H_out), y_f32.shape
    assert bool(jnp.all(jnp.isfinite(y_f32)))
    assert bool(jnp.allclose(y_f32, ref, rtol=1e-4, atol=1e-4)), \
        float(jnp.max(jnp.abs(y_f32 - ref)))

    # Default bf16-in / f32-acc MXU path (same parameters: same PRNG key).
    mod_bf16 = ConvTransposeNdPallas(
        num_spatial_dims=2, in_channels=C_in, out_channels=C_out,
        kernel_size=3, stride=2, padding="valid", channel_last=True, key=k_p)
    y_bf16 = jax.block_until_ready(mod_bf16(x))
    assert y_bf16.shape == (N, W_out, C_out, H_out), y_bf16.shape
    assert bool(jnp.all(jnp.isfinite(y_bf16)))
    assert bool(jnp.allclose(y_bf16, ref, rtol=5e-2, atol=5e-2)), \
        float(jnp.max(jnp.abs(y_bf16 - ref)))

    print("KERNEL_OK")
</pallas_src>

<mosaic_0001>
module attributes {stable_mosaic.version = 11 : i64} {
  func.func @_conv_t_kernel(%arg0: i32, %arg1: i32, %arg2: memref<1x10x68xf32, #tpu.memory_space<vmem>>, %arg3: memref<16x32xf32, #tpu.memory_space<vmem>>, %arg4: memref<1x32xf32, #tpu.memory_space<vmem>>, %arg5: memref<1x144x32xf32, #tpu.memory_space<vmem>>) attributes {dimension_semantics = [#tpu.dimension_semantics<parallel>, #tpu.dimension_semantics<parallel>], iteration_bounds = array<i64: 2, 1>, scalar_prefetch = 0 : i64, scratch_operands = 0 : i64, tpu.core_type = #tpu.core_type<tc>, window_params = [{transform_indices = @transform_0, window_bounds = array<i64: 1, 10, 68>}, {pipeline_mode = #tpu.pipeline_mode<synchronous>, transform_indices = @transform_1, window_bounds = array<i64: 16, 32>}, {pipeline_mode = #tpu.pipeline_mode<synchronous>, transform_indices = @transform_2, window_bounds = array<i64: 1, 32>}, {transform_indices = @transform_3, window_bounds = array<i64: 1, 144, 32>}]} {
    %c9_i32 = arith.constant 9 : i32
    %0 = arith.muli %arg1, %c9_i32 : i32
    %c1_i32 = arith.constant 1 : i32
    %1 = arith.addi %0, %c1_i32 : i32
    %c0 = arith.constant 0 : index
    %2 = arith.index_cast %1 : i32 to index
    %c4 = arith.constant 4 : index
    %3 = vector.load %arg2[%c0, %2, %c4] : memref<1x10x68xf32, #tpu.memory_space<vmem>>, vector<1x9x64xf32>
    %4 = vector.shape_cast %3 : vector<1x9x64xf32> to vector<9x64xf32>
    %5 = vector.shape_cast %4 : vector<9x64xf32> to vector<144x4xf32>
    %c0_0 = arith.constant 0 : index
    %6 = arith.index_cast %1 : i32 to index
    %c0_1 = arith.constant 0 : index
    %7 = vector.load %arg2[%c0_0, %6, %c0_1] : memref<1x10x68xf32, #tpu.memory_space<vmem>>, vector<1x9x64xf32>
    %8 = vector.shape_cast %7 : vector<1x9x64xf32> to vector<9x64xf32>
    %9 = vector.shape_cast %8 : vector<9x64xf32> to vector<144x4xf32>
    %c0_i32 = arith.constant 0 : i32
    %10 = arith.addi %0, %c0_i32 : i32
    %c0_2 = arith.constant 0 : index
    %11 = arith.index_cast %10 : i32 to index
    %c4_3 = arith.constant 4 : index
    %12 = vector.load %arg2[%c0_2, %11, %c4_3] : memref<1x10x68xf32, #tpu.memory_space<vmem>>, vector<1x9x64xf32>
    %13 = vector.shape_cast %12 : vector<1x9x64xf32> to vector<9x64xf32>
    %14 = vector.shape_cast %13 : vector<9x64xf32> to vector<144x4xf32>
    %c0_4 = arith.constant 0 : index
    %15 = arith.index_cast %10 : i32 to index
    %c0_5 = arith.constant 0 : index
    %16 = vector.load %arg2[%c0_4, %15, %c0_5] : memref<1x10x68xf32, #tpu.memory_space<vmem>>, vector<1x9x64xf32>
    %17 = vector.shape_cast %16 : vector<1x9x64xf32> to vector<9x64xf32>
    %18 = vector.shape_cast %17 : vector<9x64xf32> to vector<144x4xf32>
    %19 = tpu.concatenate %5, %9, %14, %18 in 1 : vector<144x4xf32>, vector<144x4xf32>, vector<144x4xf32>, vector<144x4xf32> -> vector<144x16xf32>
    %c0_6 = arith.constant 0 : index
    %c0_7 = arith.constant 0 : index
    %20 = vector.load %arg3[%c0_6, %c0_7] : memref<16x32xf32, #tpu.memory_space<vmem>>, vector<16x32xf32>
    %cst = arith.constant dense<0.000000e+00> : vector<144x32xf32>
    %21 = tpu.matmul %19, %20, %cst {dimension_numbers = #tpu.dot_dimension_numbers<[1], [0], [0], [1], [0, 0, 1, 1], [], []>} : vector<144x16xf32>, vector<16x32xf32>, vector<144x32xf32> -> vector<144x32xf32>
    %c0_8 = arith.constant 0 : index
    %c0_9 = arith.constant 0 : index
    %22 = vector.load %arg4[%c0_8, %c0_9] : memref<1x32xf32, #tpu.memory_space<vmem>>, vector<1x32xf32>
    %23 = vector.broadcast %22 : vector<1x32xf32> to vector<144x32xf32>
    %24 = arith.addf %21, %23 : vector<144x32xf32>
    %c0_10 = arith.constant 0 : index
    %c0_11 = arith.constant 0 : index
    %c0_12 = arith.constant 0 : index
    %25 = vector.load %arg5[%c0_10, %c0_11, %c0_12] : memref<1x144x32xf32, #tpu.memory_space<vmem>>, vector<1x144x32xf32>
    %26 = vector.shape_cast %25 : vector<1x144x32xf32> to vector<144x32xf32>
    %27 = vector.shape_cast %24 : vector<144x32xf32> to vector<1x144x32xf32>
    tpu.vector_store %arg5[%c0_10, %c0_11, %c0_12], %27 {strides = array<i32>} : memref<1x144x32xf32, #tpu.memory_space<vmem>>, vector<1x144x32xf32>,
    return
  }
  func.func @transform_0(%arg0: i32, %arg1: i32) -> (i32, i32, i32) {
    %c0_i32 = arith.constant 0 : i32
    %c0_i32_0 = arith.constant 0 : i32
    %c0_i32_1 = arith.constant 0 : i32
    return %arg0, %c0_i32, %c0_i32_0 : i32, i32, i32
  }
  func.func @transform_1(%arg0: i32, %arg1: i32) -> (i32, i32) {
    %c0_i32 = arith.constant 0 : i32
    %c0_i32_0 = arith.constant 0 : i32
    %c0_i32_1 = arith.constant 0 : i32
    return %c0_i32, %c0_i32_0 : i32, i32
  }
  func.func @transform_2(%arg0: i32, %arg1: i32) -> (i32, i32) {
    %c0_i32 = arith.constant 0 : i32
    %c0_i32_0 = arith.constant 0 : i32
    %c0_i32_1 = arith.constant 0 : i32
    return %c0_i32, %c0_i32_0 : i32, i32
  }
  func.func @transform_3(%arg0: i32, %arg1: i32) -> (i32, i32, i32) {
    %c0_i32 = arith.constant 0 : i32
    %c0_i32_0 = arith.constant 0 : i32
    return %arg0, %arg1, %c0_i32 : i32, i32, i32
  }
}

module attributes {stable_mosaic.version = 11 : i64} {
  func.func @_conv_t_kernel(%arg0: i32, %arg1: i32, %arg2: memref<1x10x17x4xf32, #tpu.memory_space<vmem>>, %arg3: memref<16x32xf32, #tpu.memory_space<vmem>>, %arg4: memref<1x32xf32, #tpu.memory_space<vmem>>, %arg5: memref<1x144x32xf32, #tpu.memory_space<vmem>>) attributes {dimension_semantics = [#tpu.dimension_semantics<parallel>, #tpu.dimension_semantics<parallel>], iteration_bounds = array<i64: 2, 1>, scalar_prefetch = 0 : i64, scratch_operands = 0 : i64, tpu.core_type = #tpu.core_type<tc>, window_params = [{transform_indices = @transform_0, window_bounds = array<i64: 1, 10, 17, 4>}, {pipeline_mode = #tpu.pipeline_mode<synchronous>, transform_indices = @transform_1, window_bounds = array<i64: 16, 32>}, {pipeline_mode = #tpu.pipeline_mode<synchronous>, transform_indices = @transform_2, window_bounds = array<i64: 1, 32>}, {transform_indices = @transform_3, window_bounds = array<i64: 1, 144, 32>}]} {
    %c9_i32 = arith.constant 9 : i32
    %0 = arith.muli %arg1, %c9_i32 : i32
    %c1_i32 = arith.constant 1 : i32
    %1 = arith.addi %0, %c1_i32 : i32
    %c0 = arith.constant 0 : index
    %2 = arith.index_cast %1 : i32 to index
    %c1 = arith.constant 1 : index
    %c0_0 = arith.constant 0 : index
    %3 = vector.load %arg2[%c0, %2, %c1, %c0_0] : memref<1x10x17x4xf32, #tpu.memory_space<vmem>>, vector<1x9x16x4xf32>
    %4 = vector.shape_cast %3 : vector<1x9x16x4xf32> to vector<9x16x4xf32>
    %5 = vector.shape_cast %4 : vector<9x16x4xf32> to vector<144x4xf32>
    %c0_1 = arith.constant 0 : index
    %6 = arith.index_cast %1 : i32 to index
    %c0_2 = arith.constant 0 : index
    %c0_3 = arith.constant 0 : index
    %7 = vector.load %arg2[%c0_1, %6, %c0_2, %c0_3] : memref<1x10x17x4xf32, #tpu.memory_space<vmem>>, vector<1x9x16x4xf32>
    %8 = vector.shape_cast %7 : vector<1x9x16x4xf32> to vector<9x16x4xf32>
    %9 = vector.shape_cast %8 : vector<9x16x4xf32> to vector<144x4xf32>
    %c0_i32 = arith.constant 0 : i32
    %10 = arith.addi %0, %c0_i32 : i32
    %c0_4 = arith.constant 0 : index
    %11 = arith.index_cast %10 : i32 to index
    %c1_5 = arith.constant 1 : index
    %c0_6 = arith.constant 0 : index
    %12 = vector.load %arg2[%c0_4, %11, %c1_5, %c0_6] : memref<1x10x17x4xf32, #tpu.memory_space<vmem>>, vector<1x9x16x4xf32>
    %13 = vector.shape_cast %12 : vector<1x9x16x4xf32> to vector<9x16x4xf32>
    %14 = vector.shape_cast %13 : vector<9x16x4xf32> to vector<144x4xf32>
    %c0_7 = arith.constant 0 : index
    %15 = arith.index_cast %10 : i32 to index
    %c0_8 = arith.constant 0 : index
    %c0_9 = arith.constant 0 : index
    %16 = vector.load %arg2[%c0_7, %15, %c0_8, %c0_9] : memref<1x10x17x4xf32, #tpu.memory_space<vmem>>, vector<1x9x16x4xf32>
    %17 = vector.shape_cast %16 : vector<1x9x16x4xf32> to vector<9x16x4xf32>
    %18 = vector.shape_cast %17 : vector<9x16x4xf32> to vector<144x4xf32>
    %19 = tpu.concatenate %5, %9, %14, %18 in 1 : vector<144x4xf32>, vector<144x4xf32>, vector<144x4xf32>, vector<144x4xf32> -> vector<144x16xf32>
    %c0_10 = arith.constant 0 : index
    %c0_11 = arith.constant 0 : index
    %20 = vector.load %arg3[%c0_10, %c0_11] : memref<16x32xf32, #tpu.memory_space<vmem>>, vector<16x32xf32>
    %cst = arith.constant dense<0.000000e+00> : vector<144x32xf32>
    %21 = tpu.matmul %19, %20, %cst {dimension_numbers = #tpu.dot_dimension_numbers<[1], [0], [0], [1], [0, 0, 1, 1], [], []>} : vector<144x16xf32>, vector<16x32xf32>, vector<144x32xf32> -> vector<144x32xf32>
    %c0_12 = arith.constant 0 : index
    %c0_13 = arith.constant 0 : index
    %22 = vector.load %arg4[%c0_12, %c0_13] : memref<1x32xf32, #tpu.memory_space<vmem>>, vector<1x32xf32>
    %23 = vector.broadcast %22 : vector<1x32xf32> to vector<144x32xf32>
    %24 = arith.addf %21, %23 : vector<144x32xf32>
    %c0_14 = arith.constant 0 : index
    %c0_15 = arith.constant 0 : index
    %c0_16 = arith.constant 0 : index
    %25 = vector.load %arg5[%c0_14, %c0_15, %c0_16] : memref<1x144x32xf32, #tpu.memory_space<vmem>>, vector<1x144x32xf32>
    %26 = vector.shape_cast %25 : vector<1x144x32xf32> to vector<144x32xf32>
    %27 = vector.shape_cast %24 : vector<144x32xf32> to vector<1x144x32xf32>
    tpu.vector_store %arg5[%c0_14, %c0_15, %c0_16], %27 {strides = array<i32>} : memref<1x144x32xf32, #tpu.memory_space<vmem>>, vector<1x144x32xf32>,
    return
  }
  func.func @transform_0(%arg0: i32, %arg1: i32) -> (i32, i32, i32, i32) {
    %c0_i32 = arith.constant 0 : i32
    %c0_i32_0 = arith.constant 0 : i32
    %c0_i32_1 = arith.constant 0 : i32
    %c0_i32_2 = arith.constant 0 : i32
    return %arg0, %c0_i32, %c0_i32_0, %c0_i32_1 : i32, i32, i32, i32
  }
  func.func @transform_1(%arg0: i32, %arg1: i32) -> (i32, i32) {
    %c0_i32 = arith.constant 0 : i32
    %c0_i32_0 = arith.constant 0 : i32
    %c0_i32_1 = arith.constant 0 : i32
    return %c0_i32, %c0_i32_0 : i32, i32
  }
  func.func @transform_2(%arg0: i32, %arg1: i32) -> (i32, i32) {
    %c0_i32 = arith.constant 0 : i32
    %c0_i32_0 = arith.constant 0 : i32
    %c0_i32_1 = arith.constant 0 : i32
    return %c0_i32, %c0_i32_0 : i32, i32
  }
  func.func @transform_3(%arg0: i32, %arg1: i32) -> (i32, i32, i32) {
    %c0_i32 = arith.constant 0 : i32
    %c0_i32_0 = arith.constant 0 : i32
    return %arg0, %arg1, %c0_i32 : i32, i32, i32
  }
}

</mosaic_0001>

<llo_original>
// kernel: tpu_custom_call.1
$region0: #{tpu_custom_call.1}
  #allocation0 [shape = 'u32[]', space=smem, size = 0x4, offset = 0x4, fixed_abs, tag = 'smem constant byte address 0x4 - core index']
  #allocation1 [shape = 'u32[144,128]{1,0:T(1,128)}', space=vmem, size = 0x12000, scoped, tag = 'internal scratch']
  %s0 = inlined_call_operand.vmem [shape: f32[2,10,17,4], index: 0, kind: input, shape index: {}]
  %s1 = inlined_call_operand.vmem [shape: f32[16,32], index: 1, kind: input, shape index: {}]
  %s2 = inlined_call_operand.vmem [shape: f32[1,32], index: 2, kind: input, shape index: {}]
  %s3 = inlined_call_operand.vmem [shape: f32[2,144,32], index: 3, kind: output, shape index: {}]
  %s4 = sld [smem:[#allocation0]]
  $region45: #{tpu_custom_call.1} parent=0
    _
  %s6 = ssub.s32 1, %s4
  %s7 = scalar_select 0, %s6, %s4
  loop: start=0, step=1, limit=4
  $region2: #{tpu_custom_call.1} parent=0 // loop_pre_header
    _
  $region3: #{tpu_custom_call.1} parent=0 // loop_header
    %s9 = sphi 0, %s13
    %p10 = scmp.ge.s32.totalorder %s9, 4
    %s16 = sphi 0, %s28
    %s17 = sphi 0, %s24
    %s18 = sphi 0, %s16
    %s19 = sphi 0, %s17
    %s20 = sphi 0, %s18
    %s21 = sphi 0, %s19
    %s31 = sphi 0, %s33
    %s34 = sphi 0, %s31
    %s35 = sphi 0, %s34
    %s51 = sphi 0, %s35
    %s55 = sphi 0, %s55
    %s57 = sphi 0, %s55
    %s58 = sphi 0, %s57
    %s72 = sphi 0, %s58
    %s76 = sphi 0, %s76
    %s78 = sphi 0, %s76
    %s79 = sphi 0, %s78
    %s93 = sphi 0, %s79
    %s101 = sphi 0, %s103
    %s104 = sphi 0, %s101
    %s105 = sphi 0, %s104
    %s121 = sphi 0, %s105
  $region4: #{tpu_custom_call.1} parent=0 // loop_header_branch
    %12 = sbr.rel (%p10) target = $region8
  $region5: #{tpu_custom_call.1} parent=0 // loop_body
    %s14 = ssub.s32 %s9, 1
    %s15 = ssub.s32 %s9, 2
    %s22 = sadd.s32 1, %s17
    %p23 = scmp.ge.s32.totalorder %s22, 1
    %s24 = scalar_select %p23, 0, %s22
    %s25 = sadd.s32 1, %s16
    %s26 = scalar_select %p23, %s25, %s16
    %p27 = scmp.ge.s32.totalorder %s26, 2
    %s28 = scalar_select %p27, 0, %s26
    %s29 = ssub.s32 %s16, %s28
    %p30 = scmp.eq.s32.totalorder %s29, 0
    %s32 = sadd.s32 %s31, 1
    %s33 = scalar_select %p30, %s31, %s32
    %p36 = pneg %p30
    %p37 = scmp.eq.s32.totalorder %s9, 1
    %p38 = por %p36, %p37
    %p39 = scmp.ne.s32.totalorder %s31, %s34
    %p40 = scmp.eq.s32.totalorder %s9, 0
    %p41 = por %p39, %p40
    %p42 = scmp.ne.s32.totalorder %s31, %s34
    %p43 = scmp.eq.s32.totalorder %s14, 1
    %p44 = por %p42, %p43
    %p45 = scmp.ne.s32.totalorder %s34, %s35
    %p46 = scmp.eq.s32.totalorder %s14, 0
    %p47 = por %p45, %p46
    %p48 = scmp.ne.s32.totalorder %s34, %s35
    %p49 = scmp.eq.s32.totalorder %s15, 1
    %p50 = por %p48, %p49
    %p52 = scmp.ne.s32.totalorder %s35, %s51
    %p53 = scmp.eq.s32.totalorder %s15, 0
    %p54 = por %p52, %p53
    %s56 = sadd.s32 %s55, 1
    %p59 = scmp.eq.s32.totalorder %s9, 1
    %p60 = scmp.ne.s32.totalorder %s55, %s57
    %p61 = scmp.eq.s32.totalorder %s9, 0
    %p62 = por %p60, %p61
    %p63 = scmp.ne.s32.totalorder %s55, %s57
    %p64 = scmp.eq.s32.totalorder %s14, 1
    %p65 = por %p63, %p64
    %p66 = scmp.ne.s32.totalorder %s57, %s58
    %p67 = scmp.eq.s32.totalorder %s14, 0
    %p68 = por %p66, %p67
    %p69 = scmp.ne.s32.totalorder %s57, %s58
    %p70 = scmp.eq.s32.totalorder %s15, 1
    %p71 = por %p69, %p70
    %p73 = scmp.ne.s32.totalorder %s58, %s72
    %p74 = scmp.eq.s32.totalorder %s15, 0
    %p75 = por %p73, %p74
    %s77 = sadd.s32 %s76, 1
    %p80 = scmp.eq.s32.totalorder %s9, 1
    %p81 = scmp.ne.s32.totalorder %s76, %s78
    %p82 = scmp.eq.s32.totalorder %s9, 0
    %p83 = por %p81, %p82
    %p84 = scmp.ne.s32.totalorder %s76, %s78
    %p85 = scmp.eq.s32.totalorder %s14, 1
    %p86 = por %p84, %p85
    %p87 = scmp.ne.s32.totalorder %s78, %s79
    %p88 = scmp.eq.s32.totalorder %s14, 0
    %p89 = por %p87, %p88
    %p90 = scmp.ne.s32.totalorder %s78, %s79
    %p91 = scmp.eq.s32.totalorder %s15, 1
    %p92 = por %p90, %p91
    %p94 = scmp.ne.s32.totalorder %s79, %s93
    %p95 = scmp.eq.s32.totalorder %s15, 0
    %p96 = por %p94, %p95
    %s97 = ssub.s32 %s16, %s28
    %s98 = ssub.s32 %s17, %s24
    %s99 = sor.u32 %s97, %s98
    %p100 = scmp.eq.s32.totalorder %s99, 0
    %s102 = sadd.s32 %s101, 1
    %s103 = scalar_select %p100, %s101, %s102
    %p106 = pneg %p100
    %p107 = scmp.eq.s32.totalorder %s9, 1
    %p108 = por %p106, %p107
    %p109 = scmp.ne.s32.totalorder %s101, %s104
    %p110 = scmp.eq.s32.totalorder %s9, 0
    %p111 = por %p109, %p110
    %p112 = scmp.ne.s32.totalorder %s101, %s104
    %p113 = scmp.eq.s32.totalorder %s14, 1
    %p114 = por %p112, %p113
    %p115 = scmp.ne.s32.totalorder %s104, %s105
    %p116 = scmp.eq.s32.totalorder %s14, 0
    %p117 = por %p115, %p116
    %p118 = scmp.ne.s32.totalorder %s104, %s105
    %p119 = scmp.eq.s32.totalorder %s15, 1
    %p120 = por %p118, %p119
    %p122 = scmp.ne.s32.totalorder %s105, %s121
    %p123 = scmp.eq.s32.totalorder %s15, 0
    %p124 = por %p122, %p123
    %p125 = scmp.le.s32.totalorder 1, %s9
    %p126 = scmp.lt.s32.totalorder %s9, 3
    %p127 = pnand %p125, %p126
    %p128 = pneg %p127
    // Predicated region
    $region9: #{tpu_custom_call.1} parent=5 // pred_check
      _
    $region10: #{tpu_custom_call.1} parent=5 // pred_check_branch
      %130 = sbr.rel (%p127) target = $region12
    $region11: #{tpu_custom_call.1} parent=5 // pred_region
      %s131 = ssub.s32 %s9, 1
      // Predicated region
      $region13: #{tpu_custom_call.1} parent=11 // pred_check
        %p132 = pneg %p68
      $region14: #{tpu_custom_call.1} parent=11 // pred_check_branch
        %134 = sbr.rel (%p132) target = $region16
      $region15: #{tpu_custom_call.1} parent=11 // pred_region
        _
      $region16: #{tpu_custom_call.1} parent=11 // pred_fallthru
        _
      // Predicated region
      $region17: #{tpu_custom_call.1} parent=11 // pred_check
        %p135 = pneg %p89
      $region18: #{tpu_custom_call.1} parent=11 // pred_check_branch
        %137 = sbr.rel (%p135) target = $region20
      $region19: #{tpu_custom_call.1} parent=11 // pred_region
        _
      $region20: #{tpu_custom_call.1} parent=11 // pred_fallthru
        _
    $region12: #{tpu_custom_call.1} parent=5 // pred_fallthru
      _
    %p138 = scmp.lt.s32.totalorder %s9, 2
    // Predicated region
    $region21: #{tpu_custom_call.1} parent=5 // pred_check
      %p139 = pneg %p138
    $region22: #{tpu_custom_call.1} parent=5 // pred_check_branch
      %141 = sbr.rel (%p139) target = $region24
    $region23: #{tpu_custom_call.1} parent=5 // pred_region
      // Predicated region
      $region25: #{tpu_custom_call.1} parent=23 // pred_check
        %p142 = pneg %p41
      $region26: #{tpu_custom_call.1} parent=23 // pred_check_branch
        %144 = sbr.rel (%p142) target = $region28
      $region27: #{tpu_custom_call.1} parent=23 // pred_region
        %p145 = scmp.lt.s32.totalorder %s16, 1
        %s146 = scalar_select %p145, %s16, 1
        %s147 = smul.addr %s146, 30
        %s148 = smul.addr %s147, 8
        %s149 = scalar_lea.vmem %s0, %s148
      $region28: #{tpu_custom_call.1} parent=23 // pred_fallthru
        _
    $region24: #{tpu_custom_call.1} parent=5 // pred_fallthru
      _
    %p150 = scmp.le.s32.totalorder 1, %s9
    %p151 = scmp.lt.s32.totalorder %s9, 3
    %p152 = pnand %p150, %p151
    %p153 = pneg %p152
    // Predicated region
    $region29: #{tpu_custom_call.1} parent=5 // pred_check
      _
    $region30: #{tpu_custom_call.1} parent=5 // pred_check_branch
      %155 = sbr.rel (%p152) target = $region32
    $region31: #{tpu_custom_call.1} parent=5 // pred_region
      %s156 = ssub.s32 %s9, 1
      %p157 = scmp.lt.s32.totalorder %s18, 1
      %s158 = scalar_select %p157, %s18, 1
      %s159 = smul.addr %s158, 30
      %s160 = smul.addr %s159, 8
      %s161 = scalar_lea.vmem %s0, %s160
      %p162 = pneg %p47
      %p163 = pneg %p44
      %p164 = pneg %p68
      %p165 = pneg %p65
      %p166 = pneg %p89
      %p167 = pneg %p86
      %p168 = pneg %p117
      %p169 = pneg %p114
      %s170 = smul.u32 18, %s19
      %p171 = scmp.lt.s32.totalorder %s18, 1
      %s172 = scalar_select %p171, %s18, 1
      %p173 = scmp.lt.s32.totalorder %s170, 17
      %s174 = scalar_select %p173, %s170, 17
      %s175 = smul.addr %s172, 18
      %s176 = sadd.s32 %s174, %s175
      %s177 = smul.addr %s176, 8
      %s178 = scalar_lea.vmem %s3, %s177
      %p179 = scmp.lt.s32.totalorder %s18, 1
      %s180 = scalar_select %p179, %s18, 1
      %s181 = smul.addr %s180, 30
      %s182 = smul.addr %s181, 8
      %s183 = scalar_lea.vmem %s0, %s182
      %s184 = smul.u32 18, %s19
      %p185 = scmp.lt.s32.totalorder %s18, 1
      %s186 = scalar_select %p185, %s18, 1
      %p187 = scmp.lt.s32.totalorder %s184, 17
      %s188 = scalar_select %p187, %s184, 17
      %s189 = smul.addr %s186, 18
      %s190 = sadd.s32 %s188, %s189
      %s191 = smul.addr %s190, 8
      %s192 = scalar_lea.vmem %s3, %s191
      %s193 = smul.u32 18, %s19
      %s194 = smul.u32 %s19, 9
      %s195 = sadd.s32 %s194, 1
      %s196 = smul.u32 %s195, 24
      %s197 = scalar_lea.vmem %s183, %s196
      %v198 = vld [vmem:[%s197 + $0x1] sm:$0xff]
      %v199 = vld [vmem:[%s197 + $0x9] sm:$0xff]
      %v200 = vld [vmem:[%s197 + $0x19] sm:$0xff]
      %v201 = vld [vmem:[%s197 + $0x21] sm:$0xff]
      %v202 = vld [vmem:[%s197 + $0x31] sm:$0xff]
      %v203 = vld [vmem:[%s197 + $0x39] sm:$0xff]
      %v204 = vld [vmem:[%s197 + $0x49] sm:$0xff]
      %v205 = vld [vmem:[%s197 + $0x51] sm:$0xff]
      %v206 = vld [vmem:[%s197 + $0x61] sm:$0xff]
      %v207 = vld [vmem:[%s197 + $0x69] sm:$0xff]
      %v208 = vld [vmem:[%s197 + $0x79] sm:$0xff]
      %v209 = vld [vmem:[%s197 + $0x81] sm:$0xff]
      %v210 = vld [vmem:[%s197 + $0x91] sm:$0xff]
      %v211 = vld [vmem:[%s197 + $0x99] sm:$0xff]
      %v212 = vld [vmem:[%s197 + $0xa9] sm:$0xff]
      %v213 = vld [vmem:[%s197 + $0xb1] sm:$0xff]
      %v214 = vld [vmem:[%s197 + $0xc1] sm:$0xff]
      %v215 = vld [vmem:[%s197 + $0xc9] sm:$0xff]
      %v216 = vld [vmem:[%s197] sm:$0xff]
      %v217 = vld [vmem:[%s197 + $0x8] sm:$0xff]
      %v218 = vld [vmem:[%s197 + $0x18] sm:$0xff]
      %v219 = vld [vmem:[%s197 + $0x20] sm:$0xff]
      %v220 = vld [vmem:[%s197 + $0x30] sm:$0xff]
      %v221 = vld [vmem:[%s197 + $0x38] sm:$0xff]
      %v222 = vld [vmem:[%s197 + $0x48] sm:$0xff]
      %v223 = vld [vmem:[%s197 + $0x50] sm:$0xff]
      %v224 = vld [vmem:[%s197 + $0x60] sm:$0xff]
      %v225 = vld [vmem:[%s197 + $0x68] sm:$0xff]
      %v226 = vld [vmem:[%s197 + $0x78] sm:$0xff]
      %v227 = vld [vmem:[%s197 + $0x80] sm:$0xff]
      %v228 = vld [vmem:[%s197 + $0x90] sm:$0xff]
      %v229 = vld [vmem:[%s197 + $0x98] sm:$0xff]
      %v230 = vld [vmem:[%s197 + $0xa8] sm:$0xff]
      %v231 = vld [vmem:[%s197 + $0xb0] sm:$0xff]
      %v232 = vld [vmem:[%s197 + $0xc0] sm:$0xff]
      %v233 = vld [vmem:[%s197 + $0xc8] sm:$0xff]
      %s234 = smul.u32 %s194, 24
      %s235 = scalar_lea.vmem %s183, %s234
      %v236 = vld [vmem:[%s235 + $0x1] sm:$0xff]
      %v237 = vld [vmem:[%s235 + $0x9] sm:$0xff]
      %v238 = vld [vmem:[%s235 + $0x19] sm:$0xff]
      %v239 = vld [vmem:[%s235 + $0x21] sm:$0xff]
      %v240 = vld [vmem:[%s235 + $0x31] sm:$0xff]
      %v241 = vld [vmem:[%s235 + $0x39] sm:$0xff]
      %v242 = vld [vmem:[%s235 + $0x49] sm:$0xff]
      %v243 = vld [vmem:[%s235 + $0x51] sm:$0xff]
      %v244 = vld [vmem:[%s235 + $0x61] sm:$0xff]
      %v245 = vld [vmem:[%s235 + $0x69] sm:$0xff]
      %v246 = vld [vmem:[%s235 + $0x79] sm:$0xff]
      %v247 = vld [vmem:[%s235 + $0x81] sm:$0xff]
      %v248 = vld [vmem:[%s235 + $0x91] sm:$0xff]
      %v249 = vld [vmem:[%s235 + $0x99] sm:$0xff]
      %v250 = vld [vmem:[%s235 + $0xa9] sm:$0xff]
      %v251 = vld [vmem:[%s235 + $0xb1] sm:$0xff]
      %v252 = vld [vmem:[%s235 + $0xc1] sm:$0xff]
      %v253 = vld [vmem:[%s235 + $0xc9] sm:$0xff]
      %v254 = vld [vmem:[%s235] sm:$0xff]
      %v255 = vld [vmem:[%s235 + $0x8] sm:$0xff]
      %v256 = vld [vmem:[%s235 + $0x18] sm:$0xff]
      %v257 = vld [vmem:[%s235 + $0x20] sm:$0xff]
      %v258 = vld [vmem:[%s235 + $0x30] sm:$0xff]
      %v259 = vld [vmem:[%s235 + $0x38] sm:$0xff]
      %v260 = vld [vmem:[%s235 + $0x48] sm:$0xff]
      %v261 = vld [vmem:[%s235 + $0x50] sm:$0xff]
      %v262 = vld [vmem:[%s235 + $0x60] sm:$0xff]
      %v263 = vld [vmem:[%s235 + $0x68] sm:$0xff]
      %v264 = vld [vmem:[%s235 + $0x78] sm:$0xff]
      %v265 = vld [vmem:[%s235 + $0x80] sm:$0xff]
      %v266 = vld [vmem:[%s235 + $0x90] sm:$0xff]
      %v267 = vld [vmem:[%s235 + $0x98] sm:$0xff]
      %v268 = vld [vmem:[%s235 + $0xa8] sm:$0xff]
      %v269 = vld [vmem:[%s235 + $0xb0] sm:$0xff]
      %v270 = vld [vmem:[%s235 + $0xc0] sm:$0xff]
      %v271 = vld [vmem:[%s235 + $0xc8] sm:$0xff]
      %290 = vrot.lane.b32.xlu0 %v216, 4
      %v291 = vpop.permute.xlu0 %290
      %292 = vrot.lane.b32.xlu0 %v217, 4
      %v293 = vpop.permute.xlu0 %292
      %294 = vrot.lane.b32.xlu0 %v218, 4
      %v295 = vpop.permute.xlu0 %294
      %296 = vrot.lane.b32.xlu0 %v219, 4
      %v297 = vpop.permute.xlu0 %296
      %298 = vrot.lane.b32.xlu0 %v220, 4
      %v299 = vpop.permute.xlu0 %298
      %300 = vrot.lane.b32.xlu0 %v221, 4
      %v301 = vpop.permute.xlu0 %300
      %302 = vrot.lane.b32.xlu0 %v222, 4
      %v303 = vpop.permute.xlu0 %302
      %304 = vrot.lane.b32.xlu0 %v223, 4
      %v305 = vpop.permute.xlu0 %304
      %306 = vrot.lane.b32.xlu0 %v224, 4
      %v307 = vpop.permute.xlu0 %306
      %308 = vrot.lane.b32.xlu0 %v225, 4
      %v309 = vpop.permute.xlu0 %308
      %310 = vrot.lane.b32.xlu0 %v226, 4
      %v311 = vpop.permute.xlu0 %310
      %312 = vrot.lane.b32.xlu0 %v227, 4
      %v313 = vpop.permute.xlu0 %312
      %314 = vrot.lane.b32.xlu0 %v228, 4
      %v315 = vpop.permute.xlu0 %314
      %316 = vrot.lane.b32.xlu0 %v229, 4
      %v317 = vpop.permute.xlu0 %316
      %318 = vrot.lane.b32.xlu0 %v230, 4
      %v319 = vpop.permute.xlu0 %318
      %320 = vrot.lane.b32.xlu0 %v231, 4
      %v321 = vpop.permute.xlu0 %320
      %322 = vrot.lane.b32.xlu0 %v232, 4
      %v323 = vpop.permute.xlu0 %322
      %324 = vrot.lane.b32.xlu0 %v233, 4
      %v325 = vpop.permute.xlu0 %324
      %362 = vrot.lane.b32.xlu0 %v236, 8
      %v363 = vpop.permute.xlu0 %362
      %364 = vrot.lane.b32.xlu0 %v237, 8
      %v365 = vpop.permute.xlu0 %364
      %366 = vrot.lane.b32.xlu0 %v238, 8
      %v367 = vpop.permute.xlu0 %366
      %368 = vrot.lane.b32.xlu0 %v239, 8
      %v369 = vpop.permute.xlu0 %368
      %370 = vrot.lane.b32.xlu0 %v240, 8
      %v371 = vpop.permute.xlu0 %370
      %372 = vrot.lane.b32.xlu0 %v241, 8
      %v373 = vpop.permute.xlu0 %372
      %374 = vrot.lane.b32.xlu0 %v242, 8
      %v375 = vpop.permute.xlu0 %374
      %376 = vrot.lane.b32.xlu0 %v243, 8
      %v377 = vpop.permute.xlu0 %376
      %378 = vrot.lane.b32.xlu0 %v244, 8
      %v379 = vpop.permute.xlu0 %378
      %380 = vrot.lane.b32.xlu0 %v245, 8
      %v381 = vpop.permute.xlu0 %380
      %382 = vrot.lane.b32.xlu0 %v246, 8
      %v383 = vpop.permute.xlu0 %382
      %384 = vrot.lane.b32.xlu0 %v247, 8
      %v385 = vpop.permute.xlu0 %384
      %386 = vrot.lane.b32.xlu0 %v248, 8
      %v387 = vpop.permute.xlu0 %386
      %388 = vrot.lane.b32.xlu0 %v249, 8
      %v389 = vpop.permute.xlu0 %388
      %390 = vrot.lane.b32.xlu0 %v250, 8
      %v391 = vpop.permute.xlu0 %390
      %392 = vrot.lane.b32.xlu0 %v251, 8
      %v393 = vpop.permute.xlu0 %392
      %394 = vrot.lane.b32.xlu0 %v252, 8
      %v395 = vpop.permute.xlu0 %394
      %396 = vrot.lane.b32.xlu0 %v253, 8
      %v397 = vpop.permute.xlu0 %396
      %434 = vrot.lane.b32.xlu0 %v254, 12
      %v435 = vpop.permute.xlu0 %434
      %436 = vrot.lane.b32.xlu0 %v255, 12
      %v437 = vpop.permute.xlu0 %436
      %438 = vrot.lane.b32.xlu0 %v256, 12
      %v439 = vpop.permute.xlu0 %438
      %440 = vrot.lane.b32.xlu0 %v257, 12
      %v441 = vpop.permute.xlu0 %440
      %442 = vrot.lane.b32.xlu0 %v258, 12
      %v443 = vpop.permute.xlu0 %442
      %444 = vrot.lane.b32.xlu0 %v259, 12
      %v445 = vpop.permute.xlu0 %444
      %446 = vrot.lane.b32.xlu0 %v260, 12
      %v447 = vpop.permute.xlu0 %446
      %448 = vrot.lane.b32.xlu0 %v261, 12
      %v449 = vpop.permute.xlu0 %448
      %450 = vrot.lane.b32.xlu0 %v262, 12
      %v451 = vpop.permute.xlu0 %450
      %452 = vrot.lane.b32.xlu0 %v263, 12
      %v453 = vpop.permute.xlu0 %452
      %454 = vrot.lane.b32.xlu0 %v264, 12
      %v455 = vpop.permute.xlu0 %454
      %456 = vrot.lane.b32.xlu0 %v265, 12
      %v457 = vpop.permute.xlu0 %456
      %458 = vrot.lane.b32.xlu0 %v266, 12
      %v459 = vpop.permute.xlu0 %458
      %460 = vrot.lane.b32.xlu0 %v267, 12
      %v461 = vpop.permute.xlu0 %460
      %462 = vrot.lane.b32.xlu0 %v268, 12
      %v463 = vpop.permute.xlu0 %462
      %464 = vrot.lane.b32.xlu0 %v269, 12
      %v465 = vpop.permute.xlu0 %464
      %466 = vrot.lane.b32.xlu0 %v270, 12
      %v467 = vpop.permute.xlu0 %466
      %468 = vrot.lane.b32.xlu0 %v271, 12
      %v469 = vpop.permute.xlu0 %468
      %vm488 = vcmask 31744
      %v489 = vsel %vm488, %v198, %v291
      %v490 = vsel %vm488, %v199, %v293
      %v491 = vsel %vm488, %v200, %v295
      %v492 = vsel %vm488, %v201, %v297
      %v493 = vsel %vm488, %v202, %v299
      %v494 = vsel %vm488, %v203, %v301
      %v495 = vsel %vm488, %v204, %v303
      %v496 = vsel %vm488, %v205, %v305
      %v497 = vsel %vm488, %v206, %v307
      %v498 = vsel %vm488, %v207, %v309
      %v499 = vsel %vm488, %v208, %v311
      %v500 = vsel %vm488, %v209, %v313
      %v501 = vsel %vm488, %v210, %v315
      %v502 = vsel %vm488, %v211, %v317
      %v503 = vsel %vm488, %v212, %v319
      %v504 = vsel %vm488, %v213, %v321
      %v505 = vsel %vm488, %v214, %v323
      %v506 = vsel %vm488, %v215, %v325
      %vm507 = vcmask 64512
      %v508 = vsel %vm507, %v489, %v363
      %v509 = vsel %vm507, %v490, %v365
      %v510 = vsel %vm507, %v491, %v367
      %v511 = vsel %vm507, %v492, %v369
      %v512 = vsel %vm507, %v493, %v371
      %v513 = vsel %vm507, %v494, %v373
      %v514 = vsel %vm507, %v495, %v375
      %v515 = vsel %vm507, %v496, %v377
      %v516 = vsel %vm507, %v497, %v379
      %v517 = vsel %vm507, %v498, %v381
      %v518 = vsel %vm507, %v499, %v383
      %v519 = vsel %vm507, %v500, %v385
      %v520 = vsel %vm507, %v501, %v387
      %v521 = vsel %vm507, %v502, %v389
      %v522 = vsel %vm507, %v503, %v391
      %v523 = vsel %vm507, %v504, %v393
      %v524 = vsel %vm507, %v505, %v395
      %v525 = vsel %vm507, %v506, %v397
      %vm526 = vcmask 97280
      %v527 = vsel %vm526, %v508, %v435
      %v528 = vsel %vm526, %v509, %v437
      %v529 = vsel %vm526, %v510, %v439
      %v530 = vsel %vm526, %v511, %v441
      %v531 = vsel %vm526, %v512, %v443
      %v532 = vsel %vm526, %v513, %v445
      %v533 = vsel %vm526, %v514, %v447
      %v534 = vsel %vm526, %v515, %v449
      %v535 = vsel %vm526, %v516, %v451
      %v536 = vsel %vm526, %v517, %v453
      %v537 = vsel %vm526, %v518, %v455
      %v538 = vsel %vm526, %v519, %v457
      %v539 = vsel %vm526, %v520, %v459
      %v540 = vsel %vm526, %v521, %v461
      %v541 = vsel %vm526, %v522, %v463
      %v542 = vsel %vm526, %v523, %v465
      %v543 = vsel %vm526, %v524, %v467
      %v544 = vsel %vm526, %v525, %v469
      %v545 = vld [vmem:[%s1] sm:$0xff]
      %v546 = vld [vmem:[%s1 + $0x8] sm:$0xff]
      %v547 = vld [vmem:[%s2] sm:$0x1]
      %v549 = vlaneseq
      %v550 = vshrl.u32 %v549, 7
      %v551 = vsub.s32 0, %v550
      %v552 = vrot.slane %v547, %v551
      %vm554 = vcmask 130048
      %v556 = vsel %vm554, %v527, 0
      %v559 = vsel %vm554, %v528, 0
      %v562 = vsel %vm554, %v529, 0
      %v565 = vsel %vm554, %v530, 0
      %v568 = vsel %vm554, %v531, 0
      %v571 = vsel %vm554, %v532, 0
      %v574 = vsel %vm554, %v533, 0
      %v577 = vsel %vm554, %v534, 0
      %v580 = vsel %vm554, %v535, 0
      %v583 = vsel %vm554, %v536, 0
      %v586 = vsel %vm554, %v537, 0
      %v589 = vsel %vm554, %v538, 0
      %v592 = vsel %vm554, %v539, 0
      %v595 = vsel %vm554, %v540, 0
      %v598 = vsel %vm554, %v541, 0
      %v601 = vsel %vm554, %v542, 0
      %v604 = vsel %vm554, %v543, 0
      %v607 = vsel %vm554, %v544, 0
      %609 = vmatprep.subr.mxu0 0.0
      %610 = vmatpush1.msra.mxu0 %v545
      %611 = vmatprep.subr.mxu0 0.0
      %612 = vmatpush1.msra.mxu0 %v546
      %613 = vmatprep.subr.mxu0 0.0
      %614 = vmatpush1.msra.mxu0 0.0
      %615 = vmatprep.subr.mxu0 0.0
      %616 = vmatpush1.msra.mxu0 0.0
      %617 = vmatprep.subr.mxu0 0.0
      %618 = vmatpush1.msra.mxu0 0.0
      %619 = vmatprep.subr.mxu0 0.0
      %620 = vmatpush1.msra.mxu0 0.0
      %621 = vmatprep.subr.mxu0 0.0
      %622 = vmatpush1.msra.mxu0 0.0
      %623 = vmatprep.subr.mxu0 0.0
      %624 = vmatpush1.msra.mxu0 0.0
      %625 = vmatprep.subr.mxu0 0.0
      %626 = vmatpush1.msra.mxu0 0.0
      %627 = vmatprep.subr.mxu0 0.0
      %628 = vmatpush1.msra.mxu0 0.0
      %629 = vmatprep.subr.mxu0 0.0
      %630 = vmatpush1.msra.mxu0 0.0
      %631 = vmatprep.subr.mxu0 0.0
      %632 = vmatpush1.msra.mxu0 0.0
      %633 = vmatprep.subr.mxu0 0.0
      %634 = vmatpush1.msra.mxu0 0.0
      %635 = vmatprep.subr.mxu0 0.0
      %636 = vmatpush1.msra.mxu0 0.0
      %637 = vmatprep.subr.mxu0 0.0
      %638 = vmatpush1.msra.mxu0 0.0
      %639 = vmatprep.subr.mxu0 0.0
      %640 = vmatpush1.msra.mxu0 0.0
      %641 = vmatprep.subr.mxu0 0.0
      %642 = vmatpush1.msra.mxu0 0.0
      %643 = vmatprep.subr.mxu0 0.0
      %644 = vmatpush1.msra.mxu0 0.0
      %645 = vmatprep.subr.mxu0 0.0
      %646 = vmatpush1.msra.mxu0 0.0
      %647 = vmatprep.subr.mxu0 0.0
      %648 = vmatpush1.msra.mxu0 0.0
      %649 = vmatprep.subr.mxu0 0.0
      %650 = vmatpush1.msra.mxu0 0.0
      %651 = vmatprep.subr.mxu0 0.0
      %652 = vmatpush1.msra.mxu0 0.0
      %653 = vmatprep.subr.mxu0 0.0
      %654 = vmatpush1.msra.mxu0 0.0
      %655 = vmatprep.subr.mxu0 0.0
      %656 = vmatpush1.msra.mxu0 0.0
      %657 = vmatprep.subr.mxu0 0.0
      %658 = vmatpush1.msra.mxu0 0.0
      %659 = vmatprep.subr.mxu0 0.0
      %660 = vmatpush1.msra.mxu0 0.0
      %661 = vmatprep.subr.mxu0 0.0
      %662 = vmatpush1.msra.mxu0 0.0
      %663 = vmatprep.subr.mxu0 0.0
      %664 = vmatpush1.msra.mxu0 0.0
      %665 = vmatprep.subr.mxu0 0.0
      %666 = vmatpush1.msra.mxu0 0.0
      %667 = vmatprep.subr.mxu0 0.0
      %668 = vmatpush1.msra.mxu0 0.0
      %669 = vmatprep.subr.mxu0 0.0
      %670 = vmatpush1.msra.mxu0 0.0
      %671 = vmatprep.subr.mxu0 0.0
      %672 = vmatpush1.msra.mxu0 0.0
      %673 = vmatprep.mubr.f32.mxu0 0.0
      %674 = vmatmul.mubr.f32.gmra.mrb[0].mxu0 %v556
      %v675 = vpop.f32.mrb[0].mxu0
      %v676 = vadd.f32 %v552, %v675
      %v677 = vpop.f32.mrb[0].mxu0
      %678 = vmatprep.mubr.f32.mxu0 0.0
      %679 = vmatmul.mubr.f32.gmra.mrb[0].mxu0 %v559
      %v680 = vpop.f32.mrb[0].mxu0
      %v681 = vadd.f32 %v552, %v680
      %v682 = vpop.f32.mrb[0].mxu0
      %683 = vmatprep.mubr.f32.mxu0 0.0
      %684 = vmatmul.mubr.f32.gmra.mrb[0].mxu0 %v562
      %v685 = vpop.f32.mrb[0].mxu0
      %v686 = vadd.f32 %v552, %v685
      %v687 = vpop.f32.mrb[0].mxu0
      %688 = vmatprep.mubr.f32.mxu0 0.0
      %689 = vmatmul.mubr.f32.gmra.mrb[0].mxu0 %v565
      %v690 = vpop.f32.mrb[0].mxu0
      %v691 = vadd.f32 %v552, %v690
      %v692 = vpop.f32.mrb[0].mxu0
      %693 = vmatprep.mubr.f32.mxu0 0.0
      %694 = vmatmul.mubr.f32.gmra.mrb[0].mxu0 %v568
      %v695 = vpop.f32.mrb[0].mxu0
      %v696 = vadd.f32 %v552, %v695
      %v697 = vpop.f32.mrb[0].mxu0
      %698 = vmatprep.mubr.f32.mxu0 0.0
      %699 = vmatmul.mubr.f32.gmra.mrb[0].mxu0 %v571
      %v700 = vpop.f32.mrb[0].mxu0
      %v701 = vadd.f32 %v552, %v700
      %v702 = vpop.f32.mrb[0].mxu0
      %703 = vmatprep.mubr.f32.mxu0 0.0
      %704 = vmatmul.mubr.f32.gmra.mrb[0].mxu0 %v574
      %v705 = vpop.f32.mrb[0].mxu0
      %v706 = vadd.f32 %v552, %v705
      %v707 = vpop.f32.mrb[0].mxu0
      %708 = vmatprep.mubr.f32.mxu0 0.0
      %709 = vmatmul.mubr.f32.gmra.mrb[0].mxu0 %v577
      %v710 = vpop.f32.mrb[0].mxu0
      %v711 = vadd.f32 %v552, %v710
      %v712 = vpop.f32.mrb[0].mxu0
      %713 = vmatprep.mubr.f32.mxu0 0.0
      %714 = vmatmul.mubr.f32.gmra.mrb[0].mxu0 %v580
      %v715 = vpop.f32.mrb[0].mxu0
      %v716 = vadd.f32 %v552, %v715
      %v717 = vpop.f32.mrb[0].mxu0
      %718 = vmatprep.mubr.f32.mxu0 0.0
      %719 = vmatmul.mubr.f32.gmra.mrb[0].mxu0 %v583
      %v720 = vpop.f32.mrb[0].mxu0
      %v721 = vadd.f32 %v552, %v720
      %v722 = vpop.f32.mrb[0].mxu0
      %723 = vmatprep.mubr.f32.mxu0 0.0
      %724 = vmatmul.mubr.f32.gmra.mrb[0].mxu0 %v586
      %v725 = vpop.f32.mrb[0].mxu0
      %v726 = vadd.f32 %v552, %v725
      %v727 = vpop.f32.mrb[0].mxu0
      %728 = vmatprep.mubr.f32.mxu0 0.0
      %729 = vmatmul.mubr.f32.gmra.mrb[0].mxu0 %v589
      %v730 = vpop.f32.mrb[0].mxu0
      %v731 = vadd.f32 %v552, %v730
      %v732 = vpop.f32.mrb[0].mxu0
      %733 = vmatprep.mubr.f32.mxu0 0.0
      %734 = vmatmul.mubr.f32.gmra.mrb[0].mxu0 %v592
      %v735 = vpop.f32.mrb[0].mxu0
      %v736 = vadd.f32 %v552, %v735
      %v737 = vpop.f32.mrb[0].mxu0
      %738 = vmatprep.mubr.f32.mxu0 0.0
      %739 = vmatmul.mubr.f32.gmra.mrb[0].mxu0 %v595
      %v740 = vpop.f32.mrb[0].mxu0
      %v741 = vadd.f32 %v552, %v740
      %v742 = vpop.f32.mrb[0].mxu0
      %743 = vmatprep.mubr.f32.mxu0 0.0
      %744 = vmatmul.mubr.f32.gmra.mrb[0].mxu0 %v598
      %v745 = vpop.f32.mrb[0].mxu0
      %v746 = vadd.f32 %v552, %v745
      %v747 = vpop.f32.mrb[0].mxu0
      %748 = vmatprep.mubr.f32.mxu0 0.0
      %749 = vmatmul.mubr.f32.gmra.mrb[0].mxu0 %v601
      %v750 = vpop.f32.mrb[0].mxu0
      %v751 = vadd.f32 %v552, %v750
      %v752 = vpop.f32.mrb[0].mxu0
      %753 = vmatprep.mubr.f32.mxu0 0.0
      %754 = vmatmul.mubr.f32.gmra.mrb[0].mxu0 %v604
      %v755 = vpop.f32.mrb[0].mxu0
      %v756 = vadd.f32 %v552, %v755
      %v757 = vpop.f32.mrb[0].mxu0
      %758 = vmatprep.mubr.f32.mxu0 0.0
      %759 = vmatmul.mubr.f32.gmra.mrb[0].mxu0 %v607
      %v760 = vpop.f32.mrb[0].mxu0
      %v761 = vadd.f32 %v552, %v760
      %v762 = vpop.f32.mrb[0].mxu0
      %763 = vdwg.mxu0
      %vm764 = vcmask 261120
      %765 = vst.msk [vmem:[%s192] sm:$0xff] %vm764, %v676
      %766 = vst.msk [vmem:[%s192 + $0x8] sm:$0xff] %vm764, %v681
      %767 = vst.msk [vmem:[%s192 + $0x10] sm:$0xff] %vm764, %v686
      %768 = vst.msk [vmem:[%s192 + $0x18] sm:$0xff] %vm764, %v691
      %769 = vst.msk [vmem:[%s192 + $0x20] sm:$0xff] %vm764, %v696
      %770 = vst.msk [vmem:[%s192 + $0x28] sm:$0xff] %vm764, %v701
      %771 = vst.msk [vmem:[%s192 + $0x30] sm:$0xff] %vm764, %v706
      %772 = vst.msk [vmem:[%s192 + $0x38] sm:$0xff] %vm764, %v711
      %773 = vst.msk [vmem:[%s192 + $0x40] sm:$0xff] %vm764, %v716
      %774 = vst.msk [vmem:[%s192 + $0x48] sm:$0xff] %vm764, %v721
      %775 = vst.msk [vmem:[%s192 + $0x50] sm:$0xff] %vm764, %v726
      %776 = vst.msk [vmem:[%s192 + $0x58] sm:$0xff] %vm764, %v731
      %777 = vst.msk [vmem:[%s192 + $0x60] sm:$0xff] %vm764, %v736
      %778 = vst.msk [vmem:[%s192 + $0x68] sm:$0xff] %vm764, %v741
      %779 = vst.msk [vmem:[%s192 + $0x70] sm:$0xff] %vm764, %v746
      %780 = vst.msk [vmem:[%s192 + $0x78] sm:$0xff] %vm764, %v751
      %781 = vst.msk [vmem:[%s192 + $0x80] sm:$0xff] %vm764, %v756
      %782 = vst.msk [vmem:[%s192 + $0x88] sm:$0xff] %vm764, %v761
      %s783 = smul.u32 18, %s19
      %p784 = scmp.lt.s32.totalorder %s18, 1
      %s785 = scalar_select %p784, %s18, 1
      %p786 = scmp.lt.s32.totalorder %s783, 17
      %s787 = scalar_select %p786, %s783, 17
      %s788 = smul.addr %s785, 18
      %s789 = sadd.s32 %s787, %s788
      %s790 = smul.addr %s789, 8
      %s791 = scalar_lea.vmem %s3, %s790
      // Predicated region
      $region33: #{tpu_custom_call.1} parent=31 // pred_check
        %p792 = pneg %p114
      $region34: #{tpu_custom_call.1} parent=31 // pred_check_branch
        %794 = sbr.rel (%p792) target = $region36
      $region35: #{tpu_custom_call.1} parent=31 // pred_region
        %s795 = smul.u32 18, %s19
      $region36: #{tpu_custom_call.1} parent=31 // pred_fallthru
        _
    $region32: #{tpu_custom_call.1} parent=5 // pred_fallthru
      _
    %p796 = scmp.le.s32.totalorder 2, %s9
    // Predicated region
    $region37: #{tpu_custom_call.1} parent=5 // pred_check
      %p797 = pneg %p796
    $region38: #{tpu_custom_call.1} parent=5 // pred_check_branch
      %799 = sbr.rel (%p797) target = $region40
    $region39: #{tpu_custom_call.1} parent=5 // pred_region
      %s800 = ssub.s32 %s9, 2
      // Predicated region
      $region41: #{tpu_custom_call.1} parent=39 // pred_check
        %p801 = pneg %p120
      $region42: #{tpu_custom_call.1} parent=39 // pred_check_branch
        %803 = sbr.rel (%p801) target = $region44
      $region43: #{tpu_custom_call.1} parent=39 // pred_region
        %s804 = smul.u32 18, %s21
        %p805 = scmp.lt.s32.totalorder %s20, 1
        %s806 = scalar_select %p805, %s20, 1
        %p807 = scmp.lt.s32.totalorder %s804, 17
        %s808 = scalar_select %p807, %s804, 17
        %s809 = smul.addr %s806, 18
        %s810 = sadd.s32 %s808, %s809
        %s811 = smul.addr %s810, 8
        %s812 = scalar_lea.vmem %s3, %s811
      $region44: #{tpu_custom_call.1} parent=39 // pred_fallthru
        _
    $region40: #{tpu_custom_call.1} parent=5 // pred_fallthru
      _
  $region6: #{tpu_custom_call.1} parent=0 // loop_footer
    %s13 = sadd.s32 1, %s9
  $region7: #{tpu_custom_call.1} parent=0 // loop_footer_branch
    %8 = sbr.rel target = $region3
  $region8: #{tpu_custom_call.1} parent=0 // loop_exit
    _

</llo_original>
